<compile_context>
chip_gen: v7x
topology: tpu7x:2x2x1
jax: 0.10.0
libtpu: 0.0.40
codegen_flags: <defaults>
</compile_context>

<pallas_src>
import functools
import math

import jax
import jax.numpy as jnp
from jax.experimental import pallas as pl
from jax.experimental.pallas import tpu as pltpu


def _round_up(n, m):
    return (n + m - 1) // m * m


def _softplus(x):
    # PyTorch nn.Softplus(beta=1, threshold=20): x if x > 20 else log(1 + exp(x)).
    return jnp.where(x > 20.0, x, jnp.log(1.0 + jnp.exp(jnp.minimum(x, 20.0))))


def _netg_kernel(x_ref, p_ref, o_ref, *, in_size, hidden, out_size, rows):
    row_w1, row_b1, row_w2, row_b2, row_w3, row_b3 = rows
    x = x_ref[...].astype(jnp.float32)                           # (TM, in_size)
    tm = x.shape[0]

    # ---- layer 1: K = in_size is tiny -> skip the MXU, use VPU broadcast FMAs.
    h = x[:, 0:1] * p_ref[pl.ds(row_w1, 1), :] + p_ref[pl.ds(row_b1, 1), :]
    for k in range(1, in_size):
        h = h + x[:, k:k + 1] * p_ref[pl.ds(row_w1 + k, 1), :]
    h = _softplus(h)                                             # (TM, hidden)

    # ---- layer 2: dense hidden x hidden matmul on the MXU (f32 accumulate).
    w2 = p_ref[pl.ds(row_w2, hidden), :]                         # (hidden, hidden)
    h = jnp.dot(h, w2, preferred_element_type=jnp.float32) + p_ref[pl.ds(row_b2, 1), :]
    h = _softplus(h)                                             # (TM, hidden)

    # ---- output layer: width = out_size is tiny -> VPU mul + XLU lane reduce
    # ---- instead of a degenerate (lane-sparse) MXU matmul.
    b3 = p_ref[pl.ds(row_b3, 1), :][:, :out_size]                # (1, out_size)
    cols = [
        jnp.sum(h * p_ref[pl.ds(row_w3 + o, 1), :], axis=-1, keepdims=True)
        for o in range(out_size)
    ]
    out = cols[0] if out_size == 1 else jnp.concatenate(cols, axis=-1)
    del tm
    o_ref[...] = (out + b3).astype(o_ref.dtype)                  # (TM, out_size)


def netg_forward(x, params, *, tile_m=512):
    """x: (N, in_size) float32.  Returns (N, out_size) float32."""
    in_size, hidden = params["w1"].shape
    out_size = params["w3"].shape[1]
    n = x.shape[0]

    # ---- pack all parameters into one (n_rows, hidden) f32 slab (single DMA).
    row_w1 = 0
    row_b1 = in_size
    row_w2 = row_b1 + 1
    row_b2 = row_w2 + hidden
    row_w3 = row_b2 + 1
    row_b3 = row_w3 + out_size
    n_rows = _round_up(row_b3 + 1, 8)

    def as_row(v):
        r = jnp.zeros((hidden,), jnp.float32)
        return r.at[:v.shape[0]].set(v.astype(jnp.float32))

    slab = jnp.zeros((n_rows, hidden), jnp.float32)
    slab = slab.at[row_w1:row_w1 + in_size, :].set(params["w1"].astype(jnp.float32))
    slab = slab.at[row_b1, :].set(as_row(params["b1"]))
    slab = slab.at[row_w2:row_w2 + hidden, :].set(params["w2"].astype(jnp.float32))
    slab = slab.at[row_b2, :].set(as_row(params["b2"]))
    slab = slab.at[row_w3:row_w3 + out_size, :].set(params["w3"].T.astype(jnp.float32))
    slab = slab.at[row_b3, :].set(as_row(params["b3"]))

    # ---- tile the batch: pad N to a multiple of the row tile, grid over tiles.
    tm = min(tile_m, _round_up(n, 8))
    n_pad = _round_up(n, tm)
    if n_pad != n:
        x = jnp.pad(x, ((0, n_pad - n), (0, 0)))

    kernel = functools.partial(
        _netg_kernel, in_size=in_size, hidden=hidden, out_size=out_size,
        rows=(row_w1, row_b1, row_w2, row_b2, row_w3, row_b3))

    out = pl.pallas_call(
        kernel,
        out_shape=jax.ShapeDtypeStruct((n_pad, out_size), jnp.float32),
        grid=(n_pad // tm,),
        in_specs=[
            pl.BlockSpec((tm, in_size), lambda i: (i, 0)),      # batch tile
            pl.BlockSpec((n_rows, hidden), lambda i: (0, 0)),   # resident params
        ],
        out_specs=pl.BlockSpec((tm, out_size), lambda i: (i, 0)),
        compiler_params=pltpu.CompilerParams(
            dimension_semantics=("parallel",)),
    )(x, slab)
    return out[:n]


def init_params(key, in_size, hidden, out_size):
    """nn.Linear-style init; weights stored as (in_features, out_features) so the
    kernel computes x @ W + b, identical to PyTorch's x @ W_pt.T + b."""
    ks = jax.random.split(key, 6)

    def linear(kw, kb, fi, fo):
        bound = 1.0 / math.sqrt(fi)
        w = jax.random.uniform(kw, (fi, fo), jnp.float32, -bound, bound)
        b = jax.random.uniform(kb, (fo,), jnp.float32, -bound, bound)
        return w, b

    w1, b1 = linear(ks[0], ks[1], in_size, hidden)
    w2, b2 = linear(ks[2], ks[3], hidden, hidden)
    w3, b3 = linear(ks[4], ks[5], hidden, out_size)
    return dict(w1=w1, b1=b1, w2=w2, b2=b2, w3=w3, b3=b3)


def _reference_forward(x, p):
    """Pure-JAX reference with identical semantics."""
    h = _softplus(x @ p["w1"] + p["b1"])
    h = _softplus(h @ p["w2"] + p["b2"])
    return h @ p["w3"] + p["b3"]


# TODO(synk): the unused `_netG._block` helper (Linear + Conv1d(k=9) stack) is never
# called in forward(), so it is intentionally not implemented here.

if __name__ == "__main__":
    key = jax.random.PRNGKey(0)
    k_x, k_x2, k_p = jax.random.split(key, 3)

    IN_SIZE, HIDDEN, OUT_SIZE = 3, 64, 1
    params = init_params(k_p, IN_SIZE, HIDDEN, OUT_SIZE)

    # Small batch (single tile).
    x_small = jax.random.normal(k_x, (8, IN_SIZE), jnp.float32)
    out_small = jax.block_until_ready(netg_forward(x_small, params))
    ref_small = _reference_forward(x_small, params)
    assert out_small.shape == (8, OUT_SIZE), out_small.shape
    assert jnp.allclose(out_small, ref_small, atol=1e-4, rtol=1e-4)

    # Non-multiple batch (exercises padding + multi-tile grid).
    x_big = jax.random.normal(k_x2, (300, IN_SIZE), jnp.float32)
    out_big = jax.block_until_ready(netg_forward(x_big, params, tile_m=128))
    ref_big = _reference_forward(x_big, params)
    assert out_big.shape == (300, OUT_SIZE), out_big.shape
    assert jnp.allclose(out_big, ref_big, atol=1e-4, rtol=1e-4)

    print("KERNEL_OK")
</pallas_src>

<mosaic_0001>
module attributes {stable_mosaic.version = 11 : i64} {
  func.func @_netg_kernel(%arg0: i32, %arg1: memref<8x3xf32, #tpu.memory_space<vmem>>, %arg2: memref<72x64xf32, #tpu.memory_space<vmem>>, %arg3: memref<8x1xf32, #tpu.memory_space<vmem>>) attributes {dimension_semantics = [#tpu.dimension_semantics<parallel>], iteration_bounds = array<i64: 1>, scalar_prefetch = 0 : i64, scratch_operands = 0 : i64, tpu.core_type = #tpu.core_type<tc>, window_params = [{transform_indices = @transform_0, window_bounds = array<i64: 8, 3>}, {pipeline_mode = #tpu.pipeline_mode<synchronous>, transform_indices = @transform_1, window_bounds = array<i64: 72, 64>}, {transform_indices = @transform_2, window_bounds = array<i64: 8, 1>}]} {
    %c0 = arith.constant 0 : index
    %c0_0 = arith.constant 0 : index
    %0 = vector.load %arg1[%c0, %c0_0] : memref<8x3xf32, #tpu.memory_space<vmem>>, vector<8x3xf32>
    %1 = vector.extract_strided_slice %0 {offsets = [0, 0], sizes = [8, 1], strides = [1, 1]} : vector<8x3xf32> to vector<8x1xf32>
    %c0_1 = arith.constant 0 : index
    %c0_2 = arith.constant 0 : index
    %2 = vector.load %arg2[%c0_1, %c0_2] : memref<72x64xf32, #tpu.memory_space<vmem>>, vector<1x64xf32>
    %3 = vector.broadcast %1 : vector<8x1xf32> to vector<8x64xf32>
    %4 = vector.broadcast %2 : vector<1x64xf32> to vector<8x64xf32>
    %5 = arith.mulf %3, %4 : vector<8x64xf32>
    %c3 = arith.constant 3 : index
    %c0_3 = arith.constant 0 : index
    %6 = vector.load %arg2[%c3, %c0_3] : memref<72x64xf32, #tpu.memory_space<vmem>>, vector<1x64xf32>
    %7 = vector.broadcast %6 : vector<1x64xf32> to vector<8x64xf32>
    %8 = arith.addf %5, %7 : vector<8x64xf32>
    %9 = vector.extract_strided_slice %0 {offsets = [0, 1], sizes = [8, 1], strides = [1, 1]} : vector<8x3xf32> to vector<8x1xf32>
    %c1 = arith.constant 1 : index
    %c0_4 = arith.constant 0 : index
    %10 = vector.load %arg2[%c1, %c0_4] : memref<72x64xf32, #tpu.memory_space<vmem>>, vector<1x64xf32>
    %11 = vector.broadcast %9 : vector<8x1xf32> to vector<8x64xf32>
    %12 = vector.broadcast %10 : vector<1x64xf32> to vector<8x64xf32>
    %13 = arith.mulf %11, %12 : vector<8x64xf32>
    %14 = arith.addf %8, %13 : vector<8x64xf32>
    %15 = vector.extract_strided_slice %0 {offsets = [0, 2], sizes = [8, 1], strides = [1, 1]} : vector<8x3xf32> to vector<8x1xf32>
    %c2 = arith.constant 2 : index
    %c0_5 = arith.constant 0 : index
    %16 = vector.load %arg2[%c2, %c0_5] : memref<72x64xf32, #tpu.memory_space<vmem>>, vector<1x64xf32>
    %17 = vector.broadcast %15 : vector<8x1xf32> to vector<8x64xf32>
    %18 = vector.broadcast %16 : vector<1x64xf32> to vector<8x64xf32>
    %19 = arith.mulf %17, %18 : vector<8x64xf32>
    %20 = arith.addf %14, %19 : vector<8x64xf32>
    %cst = arith.constant 2.000000e+01 : f32
    %21 = vector.broadcast %cst : f32 to vector<8x64xf32>
    %22 = arith.cmpf ogt, %20, %21 : vector<8x64xf32>
    %cst_6 = arith.constant 2.000000e+01 : f32
    %23 = vector.broadcast %cst_6 : f32 to vector<8x64xf32>
    %24 = arith.minimumf %20, %23 : vector<8x64xf32>
    %25 = math.exp %24 : vector<8x64xf32>
    %cst_7 = arith.constant 1.000000e+00 : f32
    %26 = vector.broadcast %cst_7 : f32 to vector<8x64xf32>
    %27 = arith.addf %26, %25 : vector<8x64xf32>
    %28 = math.log %27 : vector<8x64xf32>
    %29 = arith.select %22, %20, %28 : vector<8x64xi1>, vector<8x64xf32>
    %c4 = arith.constant 4 : index
    %c0_8 = arith.constant 0 : index
    %30 = vector.load %arg2[%c4, %c0_8] : memref<72x64xf32, #tpu.memory_space<vmem>>, vector<64x64xf32>
    %cst_9 = arith.constant dense<0.000000e+00> : vector<8x64xf32>
    %31 = tpu.matmul %29, %30, %cst_9 {dimension_numbers = #tpu.dot_dimension_numbers<[1], [0], [0], [1], [0, 0, 1, 1], [], []>} : vector<8x64xf32>, vector<64x64xf32>, vector<8x64xf32> -> vector<8x64xf32>
    %c68 = arith.constant 68 : index
    %c0_10 = arith.constant 0 : index
    %32 = vector.load %arg2[%c68, %c0_10] : memref<72x64xf32, #tpu.memory_space<vmem>>, vector<1x64xf32>
    %33 = vector.broadcast %32 : vector<1x64xf32> to vector<8x64xf32>
    %34 = arith.addf %31, %33 : vector<8x64xf32>
    %cst_11 = arith.constant 2.000000e+01 : f32
    %35 = vector.broadcast %cst_11 : f32 to vector<8x64xf32>
    %36 = arith.cmpf ogt, %34, %35 : vector<8x64xf32>
    %cst_12 = arith.constant 2.000000e+01 : f32
    %37 = vector.broadcast %cst_12 : f32 to vector<8x64xf32>
    %38 = arith.minimumf %34, %37 : vector<8x64xf32>
    %39 = math.exp %38 : vector<8x64xf32>
    %cst_13 = arith.constant 1.000000e+00 : f32
    %40 = vector.broadcast %cst_13 : f32 to vector<8x64xf32>
    %41 = arith.addf %40, %39 : vector<8x64xf32>
    %42 = math.log %41 : vector<8x64xf32>
    %43 = arith.select %36, %34, %42 : vector<8x64xi1>, vector<8x64xf32>
    %c70 = arith.constant 70 : index
    %c0_14 = arith.constant 0 : index
    %44 = vector.load %arg2[%c70, %c0_14] : memref<72x64xf32, #tpu.memory_space<vmem>>, vector<1x64xf32>
    %45 = vector.extract_strided_slice %44 {offsets = [0, 0], sizes = [1, 1], strides = [1, 1]} : vector<1x64xf32> to vector<1x1xf32>
    %c69 = arith.constant 69 : index
    %c0_15 = arith.constant 0 : index
    %46 = vector.load %arg2[%c69, %c0_15] : memref<72x64xf32, #tpu.memory_space<vmem>>, vector<1x64xf32>
    %47 = vector.broadcast %46 : vector<1x64xf32> to vector<8x64xf32>
    %48 = arith.mulf %43, %47 : vector<8x64xf32>
    %cst_16 = arith.constant dense<0.000000e+00> : vector<8xf32>
    %49 = vector.multi_reduction <add>, %48, %cst_16 [1] : vector<8x64xf32> to vector<8xf32>
    %50 = vector.shape_cast %49 : vector<8xf32> to vector<8x1xf32>
    %51 = vector.broadcast %45 : vector<1x1xf32> to vector<8x1xf32>
    %52 = arith.addf %50, %51 : vector<8x1xf32>
    %c0_17 = arith.constant 0 : index
    %c0_18 = arith.constant 0 : index
    %53 = vector.load %arg3[%c0_17, %c0_18] : memref<8x1xf32, #tpu.memory_space<vmem>>, vector<8x1xf32>
    tpu.vector_store %arg3[%c0_17, %c0_18], %52 {strides = array<i32>} : memref<8x1xf32, #tpu.memory_space<vmem>>, vector<8x1xf32>,
    return
  }
  func.func @transform_0(%arg0: i32) -> (i32, i32) {
    %c0_i32 = arith.constant 0 : i32
    %c0_i32_0 = arith.constant 0 : i32
    return %arg0, %c0_i32 : i32, i32
  }
  func.func @transform_1(%arg0: i32) -> (i32, i32) {
    %c0_i32 = arith.constant 0 : i32
    %c0_i32_0 = arith.constant 0 : i32
    %c0_i32_1 = arith.constant 0 : i32
    return %c0_i32, %c0_i32_0 : i32, i32
  }
  func.func @transform_2(%arg0: i32) -> (i32, i32) {
    %c0_i32 = arith.constant 0 : i32
    %c0_i32_0 = arith.constant 0 : i32
    return %arg0, %c0_i32 : i32, i32
  }
}

</mosaic_0001>

<llo_original>
// kernel: tpu_custom_call.1
$region0: #{tpu_custom_call.1}
  #allocation0 [shape = 'u32[]', space=smem, size = 0x4, offset = 0x4, fixed_abs, tag = 'smem constant byte address 0x4 - core index']
  #allocation1 [shape = 'u32[144,128]{1,0:T(1,128)}', space=vmem, size = 0x12000, scoped, tag = 'internal scratch']
  %s0 = inlined_call_operand.vmem [shape: f32[8,3], index: 0, kind: input, shape index: {}]
  %s1 = inlined_call_operand.vmem [shape: f32[72,64], index: 1, kind: input, shape index: {}]
  %s2 = inlined_call_operand.vmem [shape: f32[8,1], index: 2, kind: output, shape index: {}]
  %s3 = sld [smem:[#allocation0]]
  $region18: #{tpu_custom_call.1} parent=0
    _
  %s5 = ssub.s32 1, %s3
  %s6 = scalar_select 0, %s5, %s3
  // Predicated region
  $region2: #{tpu_custom_call.1} parent=0 // pred_check
    _
  $region3: #{tpu_custom_call.1} parent=0 // pred_check_branch
    %8 = sbr.rel (0) target = $region5
  $region4: #{tpu_custom_call.1} parent=0 // pred_region
    _
  $region5: #{tpu_custom_call.1} parent=0 // pred_fallthru
    _
  // Predicated region
  $region6: #{tpu_custom_call.1} parent=0 // pred_check
    _
  $region7: #{tpu_custom_call.1} parent=0 // pred_check_branch
    %10 = sbr.rel (0) target = $region9
  $region8: #{tpu_custom_call.1} parent=0 // pred_region
    _
  $region9: #{tpu_custom_call.1} parent=0 // pred_fallthru
    _
  %v11 = vld [vmem:[%s0] sm:$0xff]
  %v12 = vld [vmem:[%s1] sm:$0x1]
  %14 = vset.pattern.permute.xlu0 0
  %15 = vperm.xlu0 %14, %v11
  %v16 = vpop.permute.xlu0 %15
  %v18 = vlaneseq
  %v19 = vshrl.u32 %v18, 7
  %v20 = vsub.s32 0, %v19
  %v21 = vrot.slane %v12, %v20
  %v22 = vmul.f32 %v16, %v21
  %v23 = vld [vmem:[%s1 + $0x3] sm:$0x1]
  %v24 = vlaneseq
  %v25 = vshrl.u32 %v24, 7
  %v26 = vsub.s32 0, %v25
  %v27 = vrot.slane %v23, %v26
  %v28 = vadd.f32 %v22, %v27
  %v29 = vld [vmem:[%s1 + $0x1] sm:$0x1]
  %30 = vset.pattern.permute.xlu0 1
  %31 = vperm.xlu0 %30, %v11
  %v32 = vpop.permute.xlu0 %31
  %v34 = vlaneseq
  %v35 = vshrl.u32 %v34, 7
  %v36 = vsub.s32 0, %v35
  %v37 = vrot.slane %v29, %v36
  %v38 = vmul.f32 %v32, %v37
  %v39 = vadd.f32 %v28, %v38
  %v40 = vld [vmem:[%s1 + $0x2] sm:$0x1]
  %41 = vset.pattern.permute.xlu0 2
  %42 = vperm.xlu0 %41, %v11
  %v43 = vpop.permute.xlu0 %42
  %v45 = vlaneseq
  %v46 = vshrl.u32 %v45, 7
  %v47 = vsub.s32 0, %v46
  %v48 = vrot.slane %v40, %v47
  %v49 = vmul.f32 %v43, %v48
  %v50 = vadd.f32 %v39, %v49
  %vm51 = vcmp.gt.f32.partialorder %v50, 20.0
  %v52 = vmin.f32 %v50, 20.0
  %v53 = vmul.f32 %v52, 1.442695
  %v54 = vpow.pop %v53
  %v55 = vadd.f32 %v54, 1.0
  %v56 = vlog2.pop %v55
  %v57 = vmul.f32 %v56, 0.6931472
  %v58 = vsel %vm51, %v50, %v57
  %v59 = vld [vmem:[%s1 + $0x4] sm:$0xff]
  %v60 = vld [vmem:[%s1 + $0xc] sm:$0xff]
  %v61 = vld [vmem:[%s1 + $0x14] sm:$0xff]
  %v62 = vld [vmem:[%s1 + $0x1c] sm:$0xff]
  %v63 = vld [vmem:[%s1 + $0x24] sm:$0xff]
  %v64 = vld [vmem:[%s1 + $0x2c] sm:$0xff]
  %v65 = vld [vmem:[%s1 + $0x34] sm:$0xff]
  %v66 = vld [vmem:[%s1 + $0x3c] sm:$0xff]
  %v67 = vld [vmem:[%s1 + $0x44] sm:$0x1]
  %v68 = vlaneseq
  %v69 = vshrl.u32 %v68, 7
  %v70 = vsub.s32 0, %v69
  %v71 = vrot.slane %v67, %v70
  %vm72 = vcmask 523264
  %v74 = vsel %vm72, %v58, 0
  %76 = vmatprep.subr.mxu0 0.0
  %77 = vmatpush1.msra.mxu0 %v59
  %78 = vmatprep.subr.mxu0 0.0
  %79 = vmatpush1.msra.mxu0 %v60
  %80 = vmatprep.subr.mxu0 0.0
  %81 = vmatpush1.msra.mxu0 %v61
  %82 = vmatprep.subr.mxu0 0.0
  %83 = vmatpush1.msra.mxu0 %v62
  %84 = vmatprep.subr.mxu0 0.0
  %85 = vmatpush1.msra.mxu0 %v63
  %86 = vmatprep.subr.mxu0 0.0
  %87 = vmatpush1.msra.mxu0 %v64
  %88 = vmatprep.subr.mxu0 0.0
  %89 = vmatpush1.msra.mxu0 %v65
  %90 = vmatprep.subr.mxu0 0.0
  %91 = vmatpush1.msra.mxu0 %v66
  %92 = vmatprep.subr.mxu0 0.0
  %93 = vmatpush1.msra.mxu0 0.0
  %94 = vmatprep.subr.mxu0 0.0
  %95 = vmatpush1.msra.mxu0 0.0
  %96 = vmatprep.subr.mxu0 0.0
  %97 = vmatpush1.msra.mxu0 0.0
  %98 = vmatprep.subr.mxu0 0.0
  %99 = vmatpush1.msra.mxu0 0.0
  %100 = vmatprep.subr.mxu0 0.0
  %101 = vmatpush1.msra.mxu0 0.0
  %102 = vmatprep.subr.mxu0 0.0
  %103 = vmatpush1.msra.mxu0 0.0
  %104 = vmatprep.subr.mxu0 0.0
  %105 = vmatpush1.msra.mxu0 0.0
  %106 = vmatprep.subr.mxu0 0.0
  %107 = vmatpush1.msra.mxu0 0.0
  %108 = vmatprep.subr.mxu0 0.0
  %109 = vmatpush1.msra.mxu0 0.0
  %110 = vmatprep.subr.mxu0 0.0
  %111 = vmatpush1.msra.mxu0 0.0
  %112 = vmatprep.subr.mxu0 0.0
  %113 = vmatpush1.msra.mxu0 0.0
  %114 = vmatprep.subr.mxu0 0.0
  %115 = vmatpush1.msra.mxu0 0.0
  %116 = vmatprep.subr.mxu0 0.0
  %117 = vmatpush1.msra.mxu0 0.0
  %118 = vmatprep.subr.mxu0 0.0
  %119 = vmatpush1.msra.mxu0 0.0
  %120 = vmatprep.subr.mxu0 0.0
  %121 = vmatpush1.msra.mxu0 0.0
  %122 = vmatprep.subr.mxu0 0.0
  %123 = vmatpush1.msra.mxu0 0.0
  %124 = vmatprep.subr.mxu0 0.0
  %125 = vmatpush1.msra.mxu0 0.0
  %126 = vmatprep.subr.mxu0 0.0
  %127 = vmatpush1.msra.mxu0 0.0
  %128 = vmatprep.subr.mxu0 0.0
  %129 = vmatpush1.msra.mxu0 0.0
  %130 = vmatprep.subr.mxu0 0.0
  %131 = vmatpush1.msra.mxu0 0.0
  %132 = vmatprep.subr.mxu0 0.0
  %133 = vmatpush1.msra.mxu0 0.0
  %134 = vmatprep.subr.mxu0 0.0
  %135 = vmatpush1.msra.mxu0 0.0
  %136 = vmatprep.subr.mxu0 0.0
  %137 = vmatpush1.msra.mxu0 0.0
  %138 = vmatprep.subr.mxu0 0.0
  %139 = vmatpush1.msra.mxu0 0.0
  %140 = vmatprep.mubr.f32.mxu0 0.0
  %141 = vmatmul.mubr.f32.gmra.mrb[0].mxu0 %v74
  %v142 = vpop.f32.mrb[0].mxu0
  %v143 = vadd.f32 %v71, %v142
  %v144 = vpop.f32.mrb[0].mxu0
  %145 = vdwg.mxu0
  %vm146 = vcmp.gt.f32.partialorder %v143, 20.0
  %v147 = vmin.f32 %v143, 20.0
  %v148 = vmul.f32 %v147, 1.442695
  %v149 = vpow.pop %v148
  %v150 = vadd.f32 %v149, 1.0
  %v151 = vlog2.pop %v150
  %v152 = vmul.f32 %v151, 0.6931472
  %v153 = vsel %vm146, %v143, %v152
  %v154 = vld [vmem:[%s1 + $0x46] sm:$0x1]
  %v155 = vld [vmem:[%s1 + $0x45] sm:$0x1]
  %v156 = vlaneseq
  %v157 = vshrl.u32 %v156, 7
  %v158 = vsub.s32 0, %v157
  %v159 = vrot.slane %v155, %v158
  %v160 = vmul.f32 %v153, %v159
  %v161 = vsel %vm72, %v160, 0.0
  %162 = vadd.xlane.f32.xlu0 %v161
  %v163 = vpop.xlane.xlu0 %162
  %v164 = vlaneseq
  %v165 = vshrl.u32 %v164, 7
  %v166 = vsub.s32 0, %v165
  %v167 = vrot.slane %v154, %v166
  %v168 = vadd.f32 %v163, %v167
  %vm169 = vcmask 7168
  %170 = vst.msk [vmem:[%s2] sm:$0xff] %vm169, %v168
  // Predicated region
  $region10: #{tpu_custom_call.1} parent=0 // pred_check
    _
  $region11: #{tpu_custom_call.1} parent=0 // pred_check_branch
    %172 = sbr.rel (0) target = $region13
  $region12: #{tpu_custom_call.1} parent=0 // pred_region
    _
  $region13: #{tpu_custom_call.1} parent=0 // pred_fallthru
    _
  // Predicated region
  $region14: #{tpu_custom_call.1} parent=0 // pred_check
    _
  $region15: #{tpu_custom_call.1} parent=0 // pred_check_branch
    %174 = sbr.rel (0) target = $region17
  $region16: #{tpu_custom_call.1} parent=0 // pred_region
    _
  $region17: #{tpu_custom_call.1} parent=0 // pred_fallthru
    _

</llo_original>
